<compile_context>
chip_gen: v5e
topology: v5e:2x2
jax: 0.10.0
libtpu: 0.0.40
codegen_flags: <defaults>
</compile_context>

<pallas_src>
import numpy as np
import jax
import jax.numpy as jnp
from jax.experimental import pallas as pl
from jax.experimental.pallas import tpu as pltpu


# ------------------------------- parameters -------------------------------- #
def init_linear_params(key, out_dim, in_dim):
    kw, kb = jax.random.split(key)
    bound = 1.0 / np.sqrt(in_dim)
    w = jax.random.uniform(kw, (out_dim, in_dim), jnp.float32, -bound, bound)
    b = jax.random.uniform(kb, (out_dim,), jnp.float32, -bound, bound)
    return w, b


def init_params(key, cfg):
    ks = jax.random.split(key, 7)
    return {
        'ps1':  init_linear_params(ks[0], cfg['p_selectivity_embedding_dim'], cfg['num_data_attribute']),
        'var1': init_linear_params(ks[1], cfg['variance_embedding_dim'],      cfg['num_data_attribute']),
        'kur1': init_linear_params(ks[2], cfg['kurtosis_embedding_dim'],      cfg['num_data_attribute']),
        'ps2':  init_linear_params(ks[3], cfg['partition_embedding_dim'],     cfg['num_partitions']),
        'var2': init_linear_params(ks[4], cfg['partition_embedding_dim'],     cfg['num_partitions']),
        'kur2': init_linear_params(ks[5], cfg['partition_embedding_dim'],     cfg['num_partitions']),
        'idx1': init_linear_params(ks[6], cfg['index_embedding_dim'],         cfg['indexable_attributes']),
    }


# --------------------- one-time fused-weight preparation -------------------- #
def _prepare_fused_weight(params, cfg, num_data_partitions, num_index_rows, size_dim):
    """Build ONE block-structured weight (K, out_pad) at prep time.

    Input-row layout of X (per batch row):
        [ size (SZ) | pcode bits (NP) | data_feat flat (P*3*A) | index flat (NI*AI) | 1 ]
    Output-column layout (first out_dim of out_pad):
        [ size (SZ) | pcode (NP) | ps2|var2|kur2 (3*PD) | index_embedding (NI*ID) ]
    Identity blocks pass size/pcode through; the trailing ones-column carries biases.
    """
    P, NI, SZ = num_data_partitions, num_index_rows, size_dim
    A = cfg['num_data_attribute']
    NP = cfg['num_partitions']
    PD = cfg['partition_embedding_dim']
    AI = cfg['indexable_attributes']
    ID = cfg['index_embedding_dim']
    f64 = np.float64  # fold in f64, cast once at the end

    # Stage-1 "scatter" matrix (P*3*A, 3*NP): data_feat.reshape(B, P*3*A) -> [hps|hvar|hkur].
    w1_big = np.zeros((P * 3 * A, 3 * NP), f64)
    b1_big = np.zeros((3 * NP,), f64)
    for i, k in enumerate(('ps1', 'var1', 'kur1')):
        w = np.asarray(params[k][0], f64)   # (d, A)
        b = np.asarray(params[k][1], f64)   # (d,)
        d = w.shape[0]
        assert P * d == NP, "P * stage1_embedding_dim must equal num_partitions"
        for p in range(P):
            r0 = (p * 3 + i) * A
            c0 = i * NP + p * d
            w1_big[r0:r0 + A, c0:c0 + d] = w.T
            b1_big[c0:c0 + d] = b

    # Stage-2 block-diagonal (3*NP, 3*PD).
    w2_bd = np.zeros((3 * NP, 3 * PD), f64)
    b2_bd = np.zeros((3 * PD,), f64)
    for i, k in enumerate(('ps2', 'var2', 'kur2')):
        w = np.asarray(params[k][0], f64)   # (PD, NP)
        b = np.asarray(params[k][1], f64)
        w2_bd[i * NP:(i + 1) * NP, i * PD:(i + 1) * PD] = w.T
        b2_bd[i * PD:(i + 1) * PD] = b

    # Fold the two activation-free stages into one linear map.
    w12 = w1_big @ w2_bd                 # (P*3*A, 3*PD)
    b12 = b1_big @ w2_bd + b2_bd         # (3*PD,)

    # Index embedding block-diagonal (NI*AI, NI*ID).
    wi = np.asarray(params['idx1'][0], f64)  # (ID, AI)
    bi = np.asarray(params['idx1'][1], f64)
    wi_big = np.zeros((NI * AI, NI * ID), f64)
    bi_big = np.zeros((NI * ID,), f64)
    for n in range(NI):
        wi_big[n * AI:(n + 1) * AI, n * ID:(n + 1) * ID] = wi.T
        bi_big[n * ID:(n + 1) * ID] = bi

    out_dim = SZ + NP + 3 * PD + NI * ID
    out_pad = max(128, -(-out_dim // 128) * 128)        # lane-dense output width
    K = SZ + NP + P * 3 * A + NI * AI + 1               # +1 = bias (ones) column

    W = np.zeros((K, out_pad), f64)
    W[0:SZ, 0:SZ] = np.eye(SZ)                                           # size passthrough
    W[SZ:SZ + NP, SZ:SZ + NP] = np.eye(NP)                               # pcode passthrough
    r_x1, c_stat = SZ + NP, SZ + NP
    W[r_x1:r_x1 + P * 3 * A, c_stat:c_stat + 3 * PD] = w12               # folded stat path
    r_xi, c_idx = r_x1 + P * 3 * A, c_stat + 3 * PD
    W[r_xi:r_xi + NI * AI, c_idx:c_idx + NI * ID] = wi_big               # index path
    W[K - 1, c_stat:c_stat + 3 * PD] = b12                               # biases via ones col
    W[K - 1, c_idx:c_idx + NI * ID] = bi_big

    return jnp.asarray(W.astype(np.float32)), K, out_dim, out_pad


# ------------------------------ fused kernel -------------------------------- #
def _fused_kernel(x_ref, w_ref, out_ref):
    # One block-structured MXU matmul produces the whole (padded) output row,
    # stored with a single lane-dense full-width vst.
    out_ref[...] = jnp.dot(x_ref[...], w_ref[...], preferred_element_type=jnp.float32)


# -------------------------------- forward ----------------------------------- #
def make_feature_embedding_forward(params, cfg, num_data_partitions, num_index_rows,
                                   size_dim, batch_tile=256):
    """Returns a jitted forward(data_size, p_code, data_feat, index_features)."""
    NP = cfg['num_partitions']
    W, K, out_dim, out_pad = _prepare_fused_weight(
        params, cfg, num_data_partitions, num_index_rows, size_dim)
    TB = batch_tile

    @jax.jit
    def forward(data_size, p_code, data_feat, index_features):
        B = data_size.shape[0]
        size_emb = data_size.reshape(B, -1).astype(jnp.float32)          # (B, SZ)
        assert size_emb.shape[1] == size_dim

        # p_code decode, fully vectorized (fuses into the X-assembly op below).
        digits = p_code.reshape(B, -1).astype(jnp.int32)                 # (B, D)
        D = digits.shape[1]
        # TODO(synk): int32 decimal join overflows for >=10 digits, and digits >9 diverge
        #             from the reference's string-join semantics.
        pows = jnp.asarray([10 ** (D - 1 - k) for k in range(D)], jnp.int32)
        pval = jnp.sum(digits * pows, axis=-1)                           # (B,)
        # TODO(synk): reference bin(val).zfill(NP) emits MORE than NP bits when
        #             val >= 2**NP; here such values are truncated to the low NP bits.
        shifts = jnp.arange(NP - 1, -1, -1, dtype=jnp.int32)             # MSB first
        pcode = ((pval[:, None] >> shifts[None, :]) & 1).astype(jnp.float32)

        x1 = data_feat.reshape(B, -1).astype(jnp.float32)                # (B, P*3*A)
        xi = index_features.reshape(B, -1).astype(jnp.float32)           # (B, NI*AI)
        ones = jnp.ones((B, 1), jnp.float32)                             # bias column
        X = jnp.concatenate([size_emb, pcode, x1, xi, ones], axis=-1)    # (B, K)
        assert X.shape[1] == K

        # Sublane-dense batch (mult. of 8); mult. of TB when the batch grid is used.
        Bp = -(-B // TB) * TB if B > TB else -(-B // 8) * 8
        if Bp != B:
            X = jnp.pad(X, ((0, Bp - B), (0, 0)))

        flops = 2 * Bp * K * out_pad
        bytes_accessed = (Bp * K + K * out_pad + Bp * out_pad) * 4
        ce = pl.CostEstimate(flops=flops, transcendentals=0, bytes_accessed=bytes_accessed)

        if Bp <= TB:
            # Whole problem is a few KiB: any tiling is pure per-step overhead.
            out = pl.pallas_call(
                _fused_kernel,
                out_shape=jax.ShapeDtypeStruct((Bp, out_pad), jnp.float32),
                in_specs=[pl.BlockSpec((Bp, K), lambda: (0, 0)),
                          pl.BlockSpec((K, out_pad), lambda: (0, 0))],
                out_specs=pl.BlockSpec((Bp, out_pad), lambda: (0, 0)),
                cost_estimate=ce,
            )(X, W)
        else:
            # Large batch: pipeline activation DMAs and shard rows across TensorCores.
            out = pl.pallas_call(
                _fused_kernel,
                out_shape=jax.ShapeDtypeStruct((Bp, out_pad), jnp.float32),
                grid=(Bp // TB,),
                in_specs=[pl.BlockSpec((TB, K), lambda i: (i, 0)),
                          pl.BlockSpec((K, out_pad), lambda i: (0, 0))],
                out_specs=pl.BlockSpec((TB, out_pad), lambda i: (i, 0)),
                compiler_params=pltpu.CompilerParams(dimension_semantics=("parallel",)),
                cost_estimate=ce,
            )(X, W)

        return out[:B, :out_dim]

    return forward


# --------------------------- numpy reference --------------------------------- #
def reference_forward(params, input_features, num_partitions):
    _, data_features, index_features = input_features
    data_size, p_code, data_feat = data_features
    B = data_size.shape[0]
    size_emb = np.asarray(data_size, np.float32).reshape(B, -1)

    # Host-python decode mirroring the PyTorch reference loop exactly.
    p_np = np.asarray(p_code)
    rows = []
    for i in range(B):
        digits = ''.join(str(int(d)) for d in p_np[i][0])
        bits = bin(int(digits))[2:].zfill(num_partitions)
        rows.append([int(c) for c in bits])
    pcode = np.asarray(rows, np.float32)

    def lin(x, wb):
        w, b = wb
        return x @ np.asarray(w, np.float32).T + np.asarray(b, np.float32)

    A = data_feat.shape[-1]
    df = np.asarray(data_feat, np.float32)
    pieces = [size_emb, pcode]
    for i, k1, k2 in ((0, 'ps1', 'ps2'), (1, 'var1', 'var2'), (2, 'kur1', 'kur2')):
        h = lin(df[:, :, i, :].reshape(-1, A), params[k1]).reshape(B, -1)
        pieces.append(lin(h, params[k2]))
    idxf = np.asarray(index_features, np.float32)
    hidx = lin(idxf.reshape(-1, idxf.shape[-1]), params['idx1']).reshape(B, -1)
    pieces.append(hidx)
    return np.concatenate(pieces, axis=-1)


if __name__ == "__main__":
    cfg = dict(
        indexable_attributes=6,
        num_partitions=16,
        num_data_attribute=5,
        attribute_embedding_dim=8,
        selectivity_embedding_dim=4,
        frequency_embedding_dim=4,
        size_embedding_dim=4,
        partition_embedding_dim=8,
        p_selectivity_embedding_dim=4,   # 4 partition-groups * 4 == num_partitions
        variance_embedding_dim=4,
        kurtosis_embedding_dim=4,
        index_embedding_dim=8,
    )
    B, NQ, P, NI = 2, 3, 4, 2

    key = jax.random.PRNGKey(0)
    kparam, kdata = jax.random.split(key)
    params = init_params(kparam, cfg)

    ks = jax.random.split(kdata, 6)
    attribute_features = jax.random.normal(ks[0], (B, NQ, cfg['indexable_attributes']), jnp.float32)
    selectivity_features = jax.random.uniform(ks[1], (B, NQ, 1), jnp.float32)
    frequency_features = jax.random.uniform(ks[2], (B, NQ, 1), jnp.float32)
    query_features = (attribute_features, selectivity_features, frequency_features)

    data_size = jax.random.uniform(ks[3], (B, 3), jnp.float32)
    p_code = jnp.array([[[0, 3, 7]], [[2, 0, 0]]], dtype=jnp.int32)   # decimal 37, 200
    data_feat = jax.random.normal(ks[4], (B, P, 3, cfg['num_data_attribute']), jnp.float32)
    data_features = (data_size, p_code, data_feat)

    index_features = jax.random.normal(ks[5], (B, NI, cfg['indexable_attributes']), jnp.float32)

    input_features = (query_features, data_features, index_features)

    forward = make_feature_embedding_forward(params, cfg, P, NI, size_dim=data_size.shape[1])
    out = forward(data_size, p_code, data_feat, index_features)
    out = jax.block_until_ready(out)

    ref = reference_forward(params, input_features, cfg['num_partitions'])
    np.testing.assert_allclose(np.asarray(out), np.asarray(ref), rtol=1e-5, atol=1e-5)
    print("KERNEL_OK")
</pallas_src>

<mosaic_0001>
module attributes {stable_mosaic.version = 11 : i64} {
  func.func @_fused_kernel(%arg0: memref<8x92xf32, #tpu.memory_space<vmem>>, %arg1: memref<92x128xf32, #tpu.memory_space<vmem>>, %arg2: memref<8x128xf32, #tpu.memory_space<vmem>>) attributes {dimension_semantics = [], scalar_prefetch = 0 : i64, scratch_operands = 0 : i64, tpu.core_type = #tpu.core_type<tc>} {
    %c0 = arith.constant 0 : index
    %c0_0 = arith.constant 0 : index
    %0 = vector.load %arg0[%c0, %c0_0] : memref<8x92xf32, #tpu.memory_space<vmem>>, vector<8x92xf32>
    %c0_1 = arith.constant 0 : index
    %c0_2 = arith.constant 0 : index
    %1 = vector.load %arg1[%c0_1, %c0_2] : memref<92x128xf32, #tpu.memory_space<vmem>>, vector<92x128xf32>
    %cst = arith.constant dense<0.000000e+00> : vector<8x128xf32>
    %2 = tpu.matmul %0, %1, %cst {dimension_numbers = #tpu.dot_dimension_numbers<[1], [0], [0], [1], [0, 0, 1, 1], [], []>} : vector<8x92xf32>, vector<92x128xf32>, vector<8x128xf32> -> vector<8x128xf32>
    %c0_3 = arith.constant 0 : index
    %c0_4 = arith.constant 0 : index
    %3 = vector.load %arg2[%c0_3, %c0_4] : memref<8x128xf32, #tpu.memory_space<vmem>>, vector<8x128xf32>
    tpu.vector_store %arg2[%c0_3, %c0_4], %2 {strides = array<i32>} : memref<8x128xf32, #tpu.memory_space<vmem>>, vector<8x128xf32>,
    return
  }
}

</mosaic_0001>

<llo_original>
// kernel: forward.1
$region0: #{forward.1}
  #allocation0 [shape = 'u32[]', space=smem, size = 0x4, offset = 0x4, fixed_abs, tag = 'smem constant byte address 0x4 - core index']
  #allocation1 [shape = 'u32[72,128]{1,0:T(1,128)}', space=vmem, size = 0x9000, scoped, tag = 'internal scratch']
  %s0 = inlined_call_operand.vmem [shape: f32[8,92], index: 0, kind: input, shape index: {}]
  %s1 = inlined_call_operand.vmem [shape: f32[92,128], index: 1, kind: input, shape index: {}]
  %s2 = inlined_call_operand.vmem [shape: f32[8,128], index: 2, kind: output, shape index: {}]
  %s3 = sld [smem:[#allocation0]]
  $region18: #{forward.1} parent=0
    _
  %s5 = ssub.s32 1, %s3
  %s6 = scalar_select 0, %s5, %s3
  // Predicated region
  $region2: #{forward.1} parent=0 // pred_check
    _
  $region3: #{forward.1} parent=0 // pred_check_branch
    %8 = sbr.rel (0) target = $region5
  $region4: #{forward.1} parent=0 // pred_region
    _
  $region5: #{forward.1} parent=0 // pred_fallthru
    _
  // Predicated region
  $region6: #{forward.1} parent=0 // pred_check
    _
  $region7: #{forward.1} parent=0 // pred_check_branch
    %10 = sbr.rel (0) target = $region9
  $region8: #{forward.1} parent=0 // pred_region
    _
  $region9: #{forward.1} parent=0 // pred_fallthru
    _
  %v11 = vld [vmem:[%s0] sm:$0xff]
  %v12 = vld [vmem:[%s1] sm:$0xff]
  %v13 = vld [vmem:[%s1 + $0x8] sm:$0xff]
  %v14 = vld [vmem:[%s1 + $0x10] sm:$0xff]
  %v15 = vld [vmem:[%s1 + $0x18] sm:$0xff]
  %v16 = vld [vmem:[%s1 + $0x20] sm:$0xff]
  %v17 = vld [vmem:[%s1 + $0x28] sm:$0xff]
  %v18 = vld [vmem:[%s1 + $0x30] sm:$0xff]
  %v19 = vld [vmem:[%s1 + $0x38] sm:$0xff]
  %v20 = vld [vmem:[%s1 + $0x40] sm:$0xff]
  %v21 = vld [vmem:[%s1 + $0x48] sm:$0xff]
  %v22 = vld [vmem:[%s1 + $0x50] sm:$0xff]
  %v23 = vld [vmem:[%s1 + $0x58] sm:$0xf]
  %vm24 = vcmask 752640
  %v26 = vsel %vm24, %v11, 0
  %vm28 = vcmask 1043456
  %v30 = vsel %vm28, %v23, 0
  %32 = vmatpush.msra.mxu0 0.0
  %33 = vmatpush.msra.mxu0 0.0
  %34 = vmatpush.msra.mxu0 0.0
  %35 = vmatpush.msra.mxu0 0.0
  %36 = vmatpush.msra.mxu0 %v30
  %37 = vmatpush.msra.mxu0 %v22
  %38 = vmatpush.msra.mxu0 %v21
  %39 = vmatpush.msra.mxu0 %v20
  %40 = vmatpush.msra.mxu0 %v19
  %41 = vmatpush.msra.mxu0 %v18
  %42 = vmatpush.msra.mxu0 %v17
  %43 = vmatpush.msra.mxu0 %v16
  %44 = vmatpush.msra.mxu0 %v15
  %45 = vmatpush.msra.mxu0 %v14
  %46 = vmatpush.msra.mxu0 %v13
  %47 = vmatpush.msra.mxu0 %v12
  %48 = vmatmul.f32.gmra.mxu0 %v26
  %v49 = vpop.f32.mrf.mxu0
  %v50 = vadd.f32 0.0, %v49
  %51 = vdwg.mxu0
  %52 = vst [vmem:[%s2] sm:$0xff] %v50
  // Predicated region
  $region10: #{forward.1} parent=0 // pred_check
    _
  $region11: #{forward.1} parent=0 // pred_check_branch
    %54 = sbr.rel (0) target = $region13
  $region12: #{forward.1} parent=0 // pred_region
    _
  $region13: #{forward.1} parent=0 // pred_fallthru
    _
  // Predicated region
  $region14: #{forward.1} parent=0 // pred_check
    _
  $region15: #{forward.1} parent=0 // pred_check_branch
    %56 = sbr.rel (0) target = $region17
  $region16: #{forward.1} parent=0 // pred_region
    _
  $region17: #{forward.1} parent=0 // pred_fallthru
    _

</llo_original>
